<compile_context>
chip_gen: v6e
topology: v6e:2x2x1
jax: 0.10.0
libtpu: 0.0.40
codegen_flags: <defaults>
</compile_context>

<pallas_src>
import jax
import jax.numpy as jnp
from jax.experimental import pallas as pl
from jax.experimental.pallas import tpu as pltpu


def _sigmoid_kernel(x_ref, o_ref):
    # Explicit f32 compute (needed on v5e where VPU/EUP lack a bf16 path;
    # a no-op cast for f32 inputs).
    x = x_ref[...].astype(jnp.float32)
    # sigmoid(x) = 1 / (1 + exp(-x)); exp lowers to the EUP.
    y = pl.reciprocal(1.0 + jnp.exp(-x), approx=False)
    o_ref[...] = y.astype(o_ref.dtype)


def my_relu_forward(x, *, lane_cols=1024, tile_bytes_target=2 * 1024 * 1024):
    """Forward of MyReLu: elementwise Sigmoid. Accepts any shape (e.g. NCHW)."""
    orig_shape = x.shape
    n = x.size
    itemsize = jnp.dtype(x.dtype).itemsize

    # Flatten to a lane-dense 2-D slab: last dim = lane_cols (multiple of 128).
    cols = lane_cols
    rows = -(-n // cols)
    # Round rows up to a multiple of 8 (sublane) so tiled blocks satisfy the
    # (8, 128) divisibility rule.
    rows = -(-rows // 8) * 8

    # Pick the biggest row-tile that keeps an input tile near `tile_bytes_target`
    # (~2 MiB): double-buffered in+out is then ~8 MiB -> fits scoped VMEM on
    # v5e / v6e / v7x with plenty of headroom.  Always a multiple of 8.
    max_tile_rows = max(8, (tile_bytes_target // (cols * itemsize)) // 8 * 8)
    tile_rows = min(max_tile_rows, rows)
    grid_rows = -(-rows // tile_rows)
    rows = grid_rows * tile_rows  # final padded row count (grid divides evenly)

    pad = rows * cols - n
    flat = x.reshape(-1)
    if pad:
        flat = jnp.pad(flat, (0, pad))
    x2d = flat.reshape(rows, cols)

    out2d = pl.pallas_call(
        _sigmoid_kernel,
        out_shape=jax.ShapeDtypeStruct((rows, cols), x.dtype),
        grid=(grid_rows,),
        in_specs=[pl.BlockSpec((tile_rows, cols), lambda i: (i, 0))],
        out_specs=pl.BlockSpec((tile_rows, cols), lambda i: (i, 0)),
        compiler_params=pltpu.CompilerParams(
            # "parallel" lets v7x shard the row axis across its 2 TensorCores;
            # harmless (no-op) on single-core v5e/v6e.
            dimension_semantics=("parallel",),
            vmem_limit_bytes=32 * 1024 * 1024,
        ),
        cost_estimate=pl.CostEstimate(
            flops=4 * n,
            transcendentals=n,
            bytes_accessed=2 * n * itemsize,
        ),
    )(x2d)

    # Drop padding and restore original (NCHW) shape.
    return out2d.reshape(-1)[:n].reshape(orig_shape)


if __name__ == "__main__":
    key = jax.random.PRNGKey(0)
    # Small NCHW input consistent with the module's usage.
    x = jax.random.normal(key, (2, 4, 16, 16), dtype=jnp.float32)

    out = jax.block_until_ready(my_relu_forward(x))

    # Correctness check against plain-JAX sigmoid.
    ref = jax.nn.sigmoid(x)
    assert out.shape == x.shape
    assert jnp.allclose(out, ref, atol=1e-6), "mismatch vs reference sigmoid"

    # Also run the exact tensor from the original script: [[1,-0.5],[-1,3]]
    # reshaped to (-1, 1, 2, 2).
    small = jnp.array([[1.0, -0.5], [-1.0, 3.0]], dtype=jnp.float32).reshape(
        1, 1, 2, 2
    )
    small_out = jax.block_until_ready(my_relu_forward(small))
    assert jnp.allclose(small_out, jax.nn.sigmoid(small), atol=1e-6)

    print("KERNEL_OK")
</pallas_src>

<mosaic_0001>
module attributes {stable_mosaic.version = 11 : i64} {
  func.func @_sigmoid_kernel(%arg0: i32, %arg1: memref<8x1024xf32, #tpu.memory_space<vmem>>, %arg2: memref<8x1024xf32, #tpu.memory_space<vmem>>) attributes {dimension_semantics = [#tpu.dimension_semantics<parallel>], iteration_bounds = array<i64: 1>, scalar_prefetch = 0 : i64, scratch_operands = 0 : i64, tpu.core_type = #tpu.core_type<tc>, window_params = [{transform_indices = @transform_0, window_bounds = array<i64: 8, 1024>}, {transform_indices = @transform_1, window_bounds = array<i64: 8, 1024>}]} {
    %c0 = arith.constant 0 : index
    %c0_0 = arith.constant 0 : index
    %0 = vector.load %arg1[%c0, %c0_0] : memref<8x1024xf32, #tpu.memory_space<vmem>>, vector<8x1024xf32>
    %cst = arith.constant 0.000000e+00 : f32
    %1 = vector.broadcast %cst : f32 to vector<8x1024xf32>
    %2 = arith.subf %1, %0 : vector<8x1024xf32>
    %3 = math.exp %2 : vector<8x1024xf32>
    %cst_1 = arith.constant 1.000000e+00 : f32
    %4 = vector.broadcast %cst_1 : f32 to vector<8x1024xf32>
    %5 = arith.addf %4, %3 : vector<8x1024xf32>
    %6 = tpu.reciprocal %5 : vector<8x1024xf32> -> vector<8x1024xf32>
    %c0_2 = arith.constant 0 : index
    %c0_3 = arith.constant 0 : index
    %7 = vector.load %arg2[%c0_2, %c0_3] : memref<8x1024xf32, #tpu.memory_space<vmem>>, vector<8x1024xf32>
    tpu.vector_store %arg2[%c0_2, %c0_3], %6 {strides = array<i32>} : memref<8x1024xf32, #tpu.memory_space<vmem>>, vector<8x1024xf32>,
    return
  }
  func.func @transform_0(%arg0: i32) -> (i32, i32) {
    %c0_i32 = arith.constant 0 : i32
    %c0_i32_0 = arith.constant 0 : i32
    return %arg0, %c0_i32 : i32, i32
  }
  func.func @transform_1(%arg0: i32) -> (i32, i32) {
    %c0_i32 = arith.constant 0 : i32
    %c0_i32_0 = arith.constant 0 : i32
    return %arg0, %c0_i32 : i32, i32
  }
}

</mosaic_0001>

<llo_original>
// kernel: tpu_custom_call.1
$region0: #{tpu_custom_call.1}
  #allocation0 [shape = 'u32[]', space=smem, size = 0x4, offset = 0x4, fixed_abs, tag = 'smem constant byte address 0x4 - core index']
  #allocation1 [shape = 'u32[144,128]{1,0:T(1,128)}', space=vmem, size = 0x12000, scoped, tag = 'internal scratch']
  %s0 = inlined_call_operand.hbm [shape: f32[8,1024], index: 0, kind: input, shape index: {}]
  %s1 = inlined_call_operand.hbm [shape: f32[8,1024], index: 1, kind: output, shape index: {}]
  %s2 = sld [smem:[#allocation0]]
  $region18: #{tpu_custom_call.1} parent=0
    _
  %s4 = ssub.s32 1, %s2
  %s5 = scalar_select 0, %s4, %s2
  $region1: #{tpu_custom_call.1} parent=0
    #allocation2 [shape = 'u8[32768]{0}', space=vmem, size = 0x8000, scoped, tag = 'input window, operand 0, single buffered']
    #allocation3 [shape = 's32[1]{0}', space=sflag, size = 0x4, scoped, tag = 'scoped memory for tpu_custom_call.1']
    #allocation4 [shape = 's32[1]{0}', space=sflag, size = 0x4, scoped, tag = 'scoped memory for tpu_custom_call.1']
    #allocation5 [shape = 'u8[32768]{0}', space=vmem, size = 0x8000, scoped, tag = 'output window, operand 0, single buffered']
    %6 = vsyncpa [#allocation3], 0
    %7 = vsyncpa [#allocation4], 0
    // Predicated region
    $region2: #{tpu_custom_call.1} parent=1 // pred_check
      _
    $region3: #{tpu_custom_call.1} parent=1 // pred_check_branch
      %9 = sbr.rel (0) target = $region5
    $region4: #{tpu_custom_call.1} parent=1 // pred_region
      %s11 = ssub.s32 1024, 1024
      %12 = vsyncadd [#allocation3], %s11
      %s14 = sshll.u32 [#allocation2], 4
      %s15 = int_to_ptr.vmem [resolvable:$true] %s14
      %17 = dma.hbm_to_vmem [thread:$0]  %s0, 1024, %s15, [#allocation3]
    $region5: #{tpu_custom_call.1} parent=1 // pred_fallthru
      _
    // Predicated region
    $region6: #{tpu_custom_call.1} parent=1 // pred_check
      _
    $region7: #{tpu_custom_call.1} parent=1 // pred_check_branch
      %19 = sbr.rel (0) target = $region9
    $region8: #{tpu_custom_call.1} parent=1 // pred_region
      %20 = dma.done [#allocation3], 1024
    $region9: #{tpu_custom_call.1} parent=1 // pred_fallthru
      _
    %v21 = vld [vmem:[#allocation2] sm:$0xff]
    %v22 = vld [vmem:[#allocation2 + $0x8] sm:$0xff]
    %v23 = vld [vmem:[#allocation2 + $0x10] sm:$0xff]
    %v24 = vld [vmem:[#allocation2 + $0x18] sm:$0xff]
    %v25 = vld [vmem:[#allocation2 + $0x20] sm:$0xff]
    %v26 = vld [vmem:[#allocation2 + $0x28] sm:$0xff]
    %v27 = vld [vmem:[#allocation2 + $0x30] sm:$0xff]
    %v28 = vld [vmem:[#allocation2 + $0x38] sm:$0xff]
    %v29 = vsub.f32 0.0, %v21
    %v30 = vsub.f32 0.0, %v22
    %v31 = vsub.f32 0.0, %v23
    %v32 = vsub.f32 0.0, %v24
    %v33 = vsub.f32 0.0, %v25
    %v34 = vsub.f32 0.0, %v26
    %v35 = vsub.f32 0.0, %v27
    %v36 = vsub.f32 0.0, %v28
    %v37 = vmul.f32 %v29, 1.442695
    %v38 = vpow.pop %v37
    %v39 = vmul.f32 %v30, 1.442695
    %v40 = vpow.pop %v39
    %v41 = vmul.f32 %v31, 1.442695
    %v42 = vpow.pop %v41
    %v43 = vmul.f32 %v32, 1.442695
    %v44 = vpow.pop %v43
    %v45 = vmul.f32 %v33, 1.442695
    %v46 = vpow.pop %v45
    %v47 = vmul.f32 %v34, 1.442695
    %v48 = vpow.pop %v47
    %v49 = vmul.f32 %v35, 1.442695
    %v50 = vpow.pop %v49
    %v51 = vmul.f32 %v36, 1.442695
    %v52 = vpow.pop %v51
    %v53 = vadd.f32 %v38, 1.0
    %v54 = vadd.f32 %v40, 1.0
    %v55 = vadd.f32 %v42, 1.0
    %v56 = vadd.f32 %v44, 1.0
    %v57 = vadd.f32 %v46, 1.0
    %v58 = vadd.f32 %v48, 1.0
    %v59 = vadd.f32 %v50, 1.0
    %v60 = vadd.f32 %v52, 1.0
    %v61 = vrcp.pop %v53
    %v62 = vrcp.pop %v54
    %v63 = vrcp.pop %v55
    %v64 = vrcp.pop %v56
    %v65 = vrcp.pop %v57
    %v66 = vrcp.pop %v58
    %v67 = vrcp.pop %v59
    %v68 = vrcp.pop %v60
    %69 = vst [vmem:[#allocation5] sm:$0xff] %v61
    %70 = vst [vmem:[#allocation5 + $0x8] sm:$0xff] %v62
    %71 = vst [vmem:[#allocation5 + $0x10] sm:$0xff] %v63
    %72 = vst [vmem:[#allocation5 + $0x18] sm:$0xff] %v64
    %73 = vst [vmem:[#allocation5 + $0x20] sm:$0xff] %v65
    %74 = vst [vmem:[#allocation5 + $0x28] sm:$0xff] %v66
    %75 = vst [vmem:[#allocation5 + $0x30] sm:$0xff] %v67
    %76 = vst [vmem:[#allocation5 + $0x38] sm:$0xff] %v68
    // Predicated region
    $region10: #{tpu_custom_call.1} parent=1 // pred_check
      _
    $region11: #{tpu_custom_call.1} parent=1 // pred_check_branch
      %78 = sbr.rel (0) target = $region13
    $region12: #{tpu_custom_call.1} parent=1 // pred_region
      %s80 = ssub.s32 1024, 1024
      %81 = vsyncadd [#allocation4], %s80
      %s83 = sshll.u32 [#allocation5], 4
      %s84 = int_to_ptr.vmem [resolvable:$true] %s83
      %86 = dma.vmem_to_hbm [thread:$0]  %s84, 1024, %s1, [#allocation4]
    $region13: #{tpu_custom_call.1} parent=1 // pred_fallthru
      _
    // Predicated region
    $region14: #{tpu_custom_call.1} parent=1 // pred_check
      _
    $region15: #{tpu_custom_call.1} parent=1 // pred_check_branch
      %88 = sbr.rel (0) target = $region17
    $region16: #{tpu_custom_call.1} parent=1 // pred_region
      %89 = dma.done [#allocation4], 1024
    $region17: #{tpu_custom_call.1} parent=1 // pred_fallthru
      _
    %90 = vsyncpa [#allocation3], 1
    %91 = vsyncpa [#allocation4], 1

</llo_original>
